<compile_context>
chip_gen: v7x
topology: tpu7x:2x2x1
jax: 0.10.0
libtpu: 0.0.40
codegen_flags: <defaults>
</compile_context>

<pallas_src>
import jax
import jax.numpy as jnp
import numpy as np
from jax.experimental import pallas as pl
from jax.experimental.pallas import tpu as pltpu

PART = 6  # self.part = 6


# ------------------------------ tiling helpers ------------------------------

def _pick_tile(s, cap=1024, align=16):
    """Rows of one pixel tile along a stripe.

    Always a multiple of the bf16 sublane packing (16) when s >= 16; the
    partial last tile is masked in-kernel, so s need not divide evenly.  A
    1024-row bf16 cap keeps the double-buffered x tile plus single-buffered
    weights well inside scoped VMEM on v5e (16 MiB) / v6e (32 MiB) /
    v7x (32-64 MiB) even at real backbone widths (C_in ~ 2048).
    """
    if s < align:
        return s                          # tiny stripe: one full-extent block
    return min(cap, (s // align) * align)


# ------------------------------ Pallas kernels ------------------------------

def _make_backbone_pool_kernel(c_feat, s_total, tm, inv_count):
    """Fused backbone stand-in (1x1 conv + bias + ReLU) + (6,1) stripe avg-pool.

    Grid = (part, batch, pixel_tile); reduction axis last.  x block is
    (1, 1, TM, C_in) bf16.  Per-tile sums accumulate into an (8, C_feat) f32
    scratch (VALU only); the 8->1 cross-sublane collapse happens at finalize.
    """
    need_mask = (s_total % tm) != 0

    def kernel(x_ref, w_ref, b_ref, o_ref, acc_ref):
        t = pl.program_id(2)

        @pl.when(t == 0)
        def _init():
            acc_ref[...] = jnp.zeros_like(acc_ref)

        x = x_ref[0, 0]                                  # (TM, C_in)  bf16
        # 1x1 conv == matmul: bf16 in, f32 accumulate on the MXU.  K-padding
        # for small C_in wastes MXU capacity but no cycles.
        y = jnp.dot(x, w_ref[...], preferred_element_type=jnp.float32)
        y = jnp.maximum(y + b_ref[...], 0.0)             # bias + ReLU (f32)

        if need_mask:                                    # partial last tile
            rows = t * tm + jax.lax.broadcasted_iota(jnp.int32, (tm, 1), 0)
            y = jnp.where(rows < s_total, y, 0.0)

        if tm % 8 == 0:
            # Sublane-preserving partial sum: the reshape is a free vreg
            # relabel and the reduce over the leading axis is pure VALU.
            acc_ref[...] += jnp.sum(y.reshape(tm // 8, 8, c_feat), axis=0)
        else:
            # Degenerate tiny-stripe path (s < 16 and not a multiple of 8).
            acc_ref[0:1, :] += jnp.sum(y, axis=0, keepdims=True)

        @pl.when(t == pl.num_programs(2) - 1)
        def _finalize():
            o_ref[0, 0] = (jnp.sum(acc_ref[...], axis=0, keepdims=True)
                           * inv_count)                  # stripe sum -> mean

    return kernel


def _classifier_kernel(p_ref, w_ref, shift_ref, o_ref):
    # All 6 part classifiers.  Per part i (add_block at eval time):
    #   Conv2d 1x1 (bias=False) on a (N, C, 1, 1) tensor == matmul,
    #   BatchNorm2d (eval): scale folded into w at init, shift added here,
    #   ReLU; Dropout == identity.
    # p: (PART, TN, C) f32   w: (PART, C, B) bf16   shift: (PART, 1, B) f32
    for i in range(PART):
        p = p_ref[i].astype(jnp.bfloat16)                # contiguous (TN, C)
        y = jnp.dot(p, w_ref[i], preferred_element_type=jnp.float32)
        o_ref[i] = jnp.maximum(y + shift_ref[i], 0.0)    # lane-dense (TN, B)


# --------------------------------- wrapper -----------------------------------

def pcb_test_forward(x_nhwc, params, featrue_H=False):
    """PCB_test forward.

    `x_nhwc` is the backbone input, channels-last (any float dtype; read as
    bf16).  Keeping the backbone channels-last avoids materializing an
    NCHW->NHWC relayout of the largest tensor in the wrapper.
    """
    N, H, W, C_in = x_nhwc.shape
    # TODO(synk): PyTorch AdaptiveAvgPool2d((6,1)) also handles H % 6 != 0 via
    # uneven bins; PCB feature maps have H divisible by 6, so we require it.
    assert H % PART == 0, "H must be divisible by 6 for the (6,1) adaptive pool"
    S = (H // PART) * W                          # pixels per horizontal stripe

    w_bb = params["backbone_w"]                  # (C_in, C_feat) bf16
    b_bb = params["backbone_b"]                  # (1, C_feat)    f32
    C_feat = w_bb.shape[1]

    # bf16 on the HBM->VMEM path (no-op if already bf16); stripe regrouping is
    # a free view.
    x = x_nhwc.astype(jnp.bfloat16).reshape(N, PART, S, C_in)

    TM = _pick_tile(S)
    KT = pl.cdiv(S, TM)

    # Explicit scoped-VMEM budget: double-buffered bf16 x tile +
    # single-buffered weights/bias + output + scratch, with 4x headroom,
    # clamped to [32 MiB, 64 MiB] (safe on v5e / v6e / v7x).
    est = (2 * TM * C_in * 2 + C_in * C_feat * 2 + C_feat * 4
           + 2 * C_feat * 4 + 8 * C_feat * 4)
    vmem_limit = int(min(64 * 2 ** 20, max(32 * 2 ** 20, 4 * est)))

    pooled = pl.pallas_call(
        _make_backbone_pool_kernel(C_feat, S, TM, 1.0 / float(S)),
        grid=(PART, N, KT),
        in_specs=[
            pl.BlockSpec((1, 1, TM, C_in), lambda p, n, t: (n, p, t, 0)),
            # Constant-index operands: single buffer (no wasted 2nd pipeline
            # buffer; matters at real C_in where the weight is MiB-scale).
            pl.BlockSpec((C_in, C_feat), lambda p, n, t: (0, 0),
                         pipeline_mode=pl.Buffered(1)),
            pl.BlockSpec((1, C_feat), lambda p, n, t: (0, 0),
                         pipeline_mode=pl.Buffered(1)),
        ],
        out_specs=pl.BlockSpec((1, 1, 1, C_feat), lambda p, n, t: (p, n, 0, 0)),
        out_shape=jax.ShapeDtypeStruct((PART, N, 1, C_feat), jnp.float32),
        scratch_shapes=[pltpu.VMEM((8, C_feat), jnp.float32)],
        compiler_params=pltpu.CompilerParams(
            dimension_semantics=("parallel", "parallel", "arbitrary"),
            vmem_limit_bytes=vmem_limit),
    )(x, w_bb, b_bb)

    pooled = pooled.reshape(PART, N, C_feat)     # drop size-1 dim (free view)

    if not featrue_H:
        # f = x.view(N, C, 6)   (tiny tensor; transpose cost negligible)
        return jnp.transpose(pooled, (1, 2, 0))

    w_cls = params["cls_w"]                      # (PART, C_feat, B) bf16
    shift = params["cls_shift"]                  # (PART, 1, B)      f32
    B = w_cls.shape[-1]

    TN = N if N <= 256 else 256                  # one MXU M-tile per grid step
    NT = pl.cdiv(N, TN)

    out = pl.pallas_call(
        _classifier_kernel,
        grid=(NT,),
        in_specs=[
            pl.BlockSpec((PART, TN, C_feat), lambda j: (0, j, 0),
                         memory_space=pltpu.MemorySpace.VMEM),
            pl.BlockSpec((PART, C_feat, B), lambda j: (0, 0, 0),
                         memory_space=pltpu.MemorySpace.VMEM),
            pl.BlockSpec((PART, 1, B), lambda j: (0, 0, 0),
                         memory_space=pltpu.MemorySpace.VMEM),
        ],
        out_specs=pl.BlockSpec((PART, TN, B), lambda j: (0, j, 0)),
        out_shape=jax.ShapeDtypeStruct((PART, N, B), jnp.float32),
        compiler_params=pltpu.CompilerParams(
            dimension_semantics=("parallel",)),
    )(pooled, w_cls, shift)

    # torch.cat(predict, 2) then view(N, C', 6)  ->  (N, B, 6)
    return jnp.transpose(out, (1, 2, 0))


# ---------------------------- params / reference -----------------------------

def init_params(key, c_in=4, c_feat=256, bottleneck=256, eps=1e-5):
    ks = jax.random.split(key, 7)
    backbone_w = 0.1 * jax.random.normal(ks[0], (c_in, c_feat), jnp.float32)
    backbone_b = 0.1 * jax.random.normal(ks[1], (1, c_feat), jnp.float32)
    cls_w = 0.1 * jax.random.normal(ks[2], (PART, c_feat, bottleneck), jnp.float32)
    gamma = 1.0 + 0.1 * jax.random.normal(ks[3], (PART, 1, bottleneck), jnp.float32)
    beta = 0.1 * jax.random.normal(ks[4], (PART, 1, bottleneck), jnp.float32)
    rmean = 0.1 * jax.random.normal(ks[5], (PART, 1, bottleneck), jnp.float32)
    rvar = jnp.abs(1.0 + 0.1 * jax.random.normal(ks[6], (PART, 1, bottleneck),
                                                 jnp.float32))
    scale = gamma / jnp.sqrt(rvar + eps)           # fold eval-mode BatchNorm
    shift = beta - rmean * scale
    return dict(
        backbone_w=backbone_w.astype(jnp.bfloat16),   # MXU inputs in bf16
        backbone_b=backbone_b,                        # f32 post-accumulation add
        cls_w=(cls_w * scale).astype(jnp.bfloat16),   # BN scale folded, bf16
        cls_shift=shift,                              # (PART, 1, B) f32
    )


def reference_forward(x_nhwc, params, featrue_H=False):
    """Pure-JAX reference with the same precision policy as the kernels
    (bf16 matmul inputs, f32 accumulation and elementwise math)."""
    xb = x_nhwc.astype(jnp.bfloat16)
    feat = jnp.einsum("nhwc,cf->nhwf", xb, params["backbone_w"],
                      preferred_element_type=jnp.float32)
    feat = jnp.maximum(feat + params["backbone_b"], 0.0)
    N, H, W, C = feat.shape
    pooled = feat.reshape(N, PART, (H // PART) * W, C).mean(axis=2)   # (N, 6, C)
    if not featrue_H:
        return jnp.transpose(pooled, (0, 2, 1))                        # (N, C, 6)
    outs = []
    for i in range(PART):
        y = jnp.dot(pooled[:, i, :].astype(jnp.bfloat16), params["cls_w"][i],
                    preferred_element_type=jnp.float32) + params["cls_shift"][i]
        outs.append(jnp.maximum(y, 0.0))
    return jnp.stack(outs, axis=2)                                     # (N, B, 6)


# ----------------------------------- main -------------------------------------

if __name__ == "__main__":
    key = jax.random.PRNGKey(0)
    pkey, xkey, x2key = jax.random.split(key, 3)

    # Backbone stand-in input, channels-last bf16 (no wrapper NCHW->NHWC
    # transpose of the largest tensor).
    N, H, W, C_in = 2, 24, 8, 4                  # H divisible by 6
    params = init_params(pkey, c_in=C_in)
    x = jax.random.normal(xkey, (N, H, W, C_in), jnp.float32).astype(jnp.bfloat16)

    out_h = jax.block_until_ready(pcb_test_forward(x, params, featrue_H=True))
    out_f = jax.block_until_ready(pcb_test_forward(x, params, featrue_H=False))
    ref_h = reference_forward(x, params, featrue_H=True)
    ref_f = reference_forward(x, params, featrue_H=False)

    B = params["cls_w"].shape[-1]
    C_feat = params["backbone_w"].shape[1]
    assert out_h.shape == (N, B, PART)
    assert out_f.shape == (N, C_feat, PART)
    np.testing.assert_allclose(np.asarray(out_h), np.asarray(ref_h),
                               rtol=1e-3, atol=1e-3)
    np.testing.assert_allclose(np.asarray(out_f), np.asarray(ref_f),
                               rtol=1e-3, atol=1e-3)

    # Second config exercises the masked partial pixel-tile path:
    # stripe = 4*5 = 20 pixels, tile = 16 rows -> 2 tiles, last one masked.
    x2 = jax.random.normal(x2key, (1, 24, 5, C_in), jnp.float32).astype(jnp.bfloat16)
    out2 = jax.block_until_ready(pcb_test_forward(x2, params, featrue_H=True))
    ref2 = reference_forward(x2, params, featrue_H=True)
    np.testing.assert_allclose(np.asarray(out2), np.asarray(ref2),
                               rtol=1e-3, atol=1e-3)

    print("KERNEL_OK")
</pallas_src>

<mosaic_0001>
module attributes {stable_mosaic.version = 11 : i64} {
  func.func @kernel(%arg0: i32, %arg1: i32, %arg2: i32, %arg3: memref<1x1x32x4xbf16, #tpu.memory_space<vmem>>, %arg4: memref<4x256xbf16, #tpu.memory_space<vmem>>, %arg5: memref<1x256xf32, #tpu.memory_space<vmem>>, %arg6: memref<1x1x1x256xf32, #tpu.memory_space<vmem>>, %arg7: memref<8x256xf32, #tpu.memory_space<vmem>>) attributes {dimension_semantics = [#tpu.dimension_semantics<parallel>, #tpu.dimension_semantics<parallel>, #tpu.dimension_semantics<arbitrary>], iteration_bounds = array<i64: 6, 2, 1>, scalar_prefetch = 0 : i64, scratch_operands = 1 : i64, tpu.core_type = #tpu.core_type<tc>, window_params = [{transform_indices = @transform_0, window_bounds = array<i64: 1, 1, 32, 4>}, {pipeline_mode = #tpu.pipeline_mode<synchronous>, transform_indices = @transform_1, window_bounds = array<i64: 4, 256>}, {pipeline_mode = #tpu.pipeline_mode<synchronous>, transform_indices = @transform_2, window_bounds = array<i64: 1, 256>}, {transform_indices = @transform_3, window_bounds = array<i64: 1, 1, 1, 256>}]} {
    %c0_i32 = arith.constant 0 : i32
    %0 = arith.cmpi eq, %arg2, %c0_i32 : i32
    %1 = arith.extui %0 : i1 to i32
    %c0_i32_0 = arith.constant 0 : i32
    %2 = arith.cmpi ne, %1, %c0_i32_0 : i32
    scf.if %2 {
      %cst_16 = arith.constant 0.000000e+00 : f32
      %20 = vector.broadcast %cst_16 : f32 to vector<8x256xf32>
      %c0_17 = arith.constant 0 : index
      %c0_18 = arith.constant 0 : index
      %21 = vector.load %arg7[%c0_17, %c0_18] : memref<8x256xf32, #tpu.memory_space<vmem>>, vector<8x256xf32>
      tpu.vector_store %arg7[%c0_17, %c0_18], %20 {strides = array<i32>} : memref<8x256xf32, #tpu.memory_space<vmem>>, vector<8x256xf32>,
    } else {
    }
    %c0 = arith.constant 0 : index
    %c0_1 = arith.constant 0 : index
    %c0_2 = arith.constant 0 : index
    %c0_3 = arith.constant 0 : index
    %3 = vector.load %arg3[%c0, %c0_1, %c0_2, %c0_3] : memref<1x1x32x4xbf16, #tpu.memory_space<vmem>>, vector<1x1x32x4xbf16>
    %4 = vector.shape_cast %3 : vector<1x1x32x4xbf16> to vector<32x4xbf16>
    %c0_4 = arith.constant 0 : index
    %c0_5 = arith.constant 0 : index
    %5 = vector.load %arg4[%c0_4, %c0_5] : memref<4x256xbf16, #tpu.memory_space<vmem>>, vector<4x256xbf16>
    %cst = arith.constant dense<0.000000e+00> : vector<32x256xf32>
    %6 = tpu.matmul %4, %5, %cst {dimension_numbers = #tpu.dot_dimension_numbers<[1], [0], [0], [1], [0, 0, 1, 1], [], []>} : vector<32x4xbf16>, vector<4x256xbf16>, vector<32x256xf32> -> vector<32x256xf32>
    %c0_6 = arith.constant 0 : index
    %c0_7 = arith.constant 0 : index
    %7 = vector.load %arg5[%c0_6, %c0_7] : memref<1x256xf32, #tpu.memory_space<vmem>>, vector<1x256xf32>
    %8 = vector.broadcast %7 : vector<1x256xf32> to vector<32x256xf32>
    %9 = arith.addf %6, %8 : vector<32x256xf32>
    %cst_8 = arith.constant 0.000000e+00 : f32
    %10 = vector.broadcast %cst_8 : f32 to vector<32x256xf32>
    %11 = arith.maximumf %9, %10 : vector<32x256xf32>
    %c0_9 = arith.constant 0 : index
    %c0_10 = arith.constant 0 : index
    %12 = vector.load %arg7[%c0_9, %c0_10] : memref<8x256xf32, #tpu.memory_space<vmem>>, vector<8x256xf32>
    %13 = vector.shape_cast %11 : vector<32x256xf32> to vector<4x8x256xf32>
    %cst_11 = arith.constant dense<0.000000e+00> : vector<8x256xf32>
    %14 = vector.multi_reduction <add>, %13, %cst_11 [0] : vector<4x8x256xf32> to vector<8x256xf32>
    %15 = arith.addf %12, %14 : vector<8x256xf32>
    %c0_12 = arith.constant 0 : index
    %c0_13 = arith.constant 0 : index
    %16 = vector.load %arg7[%c0_12, %c0_13] : memref<8x256xf32, #tpu.memory_space<vmem>>, vector<8x256xf32>
    tpu.vector_store %arg7[%c0_12, %c0_13], %15 {strides = array<i32>} : memref<8x256xf32, #tpu.memory_space<vmem>>, vector<8x256xf32>,
    %c0_i32_14 = arith.constant 0 : i32
    %17 = arith.cmpi eq, %arg2, %c0_i32_14 : i32
    %18 = arith.extui %17 : i1 to i32
    %c0_i32_15 = arith.constant 0 : i32
    %19 = arith.cmpi ne, %18, %c0_i32_15 : i32
    scf.if %19 {
      %c0_16 = arith.constant 0 : index
      %c0_17 = arith.constant 0 : index
      %20 = vector.load %arg7[%c0_16, %c0_17] : memref<8x256xf32, #tpu.memory_space<vmem>>, vector<8x256xf32>
      %cst_18 = arith.constant dense<0.000000e+00> : vector<256xf32>
      %21 = vector.multi_reduction <add>, %20, %cst_18 [0] : vector<8x256xf32> to vector<256xf32>
      %22 = vector.shape_cast %21 : vector<256xf32> to vector<1x256xf32>
      %cst_19 = arith.constant 3.125000e-02 : f32
      %23 = vector.broadcast %cst_19 : f32 to vector<1x256xf32>
      %24 = arith.mulf %22, %23 : vector<1x256xf32>
      %c0_20 = arith.constant 0 : index
      %c0_21 = arith.constant 0 : index
      %c0_22 = arith.constant 0 : index
      %c0_23 = arith.constant 0 : index
      %25 = vector.load %arg6[%c0_20, %c0_21, %c0_22, %c0_23] : memref<1x1x1x256xf32, #tpu.memory_space<vmem>>, vector<1x1x1x256xf32>
      %26 = vector.shape_cast %25 : vector<1x1x1x256xf32> to vector<1x256xf32>
      %27 = vector.shape_cast %24 : vector<1x256xf32> to vector<1x1x1x256xf32>
      tpu.vector_store %arg6[%c0_20, %c0_21, %c0_22, %c0_23], %27 {strides = array<i32>} : memref<1x1x1x256xf32, #tpu.memory_space<vmem>>, vector<1x1x1x256xf32>,
    } else {
    }
    return
  }
  func.func @transform_0(%arg0: i32, %arg1: i32, %arg2: i32) -> (i32, i32, i32, i32) {
    %c0_i32 = arith.constant 0 : i32
    %c0_i32_0 = arith.constant 0 : i32
    return %arg1, %arg0, %arg2, %c0_i32 : i32, i32, i32, i32
  }
  func.func @transform_1(%arg0: i32, %arg1: i32, %arg2: i32) -> (i32, i32) {
    %c0_i32 = arith.constant 0 : i32
    %c0_i32_0 = arith.constant 0 : i32
    %c0_i32_1 = arith.constant 0 : i32
    return %c0_i32, %c0_i32_0 : i32, i32
  }
  func.func @transform_2(%arg0: i32, %arg1: i32, %arg2: i32) -> (i32, i32) {
    %c0_i32 = arith.constant 0 : i32
    %c0_i32_0 = arith.constant 0 : i32
    %c0_i32_1 = arith.constant 0 : i32
    return %c0_i32, %c0_i32_0 : i32, i32
  }
  func.func @transform_3(%arg0: i32, %arg1: i32, %arg2: i32) -> (i32, i32, i32, i32) {
    %c0_i32 = arith.constant 0 : i32
    %c0_i32_0 = arith.constant 0 : i32
    %c0_i32_1 = arith.constant 0 : i32
    return %arg0, %arg1, %c0_i32, %c0_i32_0 : i32, i32, i32, i32
  }
}

</mosaic_0001>

<llo_original>
// kernel: tpu_custom_call.1
$region0: #{tpu_custom_call.1}
  #allocation0 [shape = 'u32[]', space=smem, size = 0x4, offset = 0x4, fixed_abs, tag = 'smem constant byte address 0x4 - core index']
  #allocation1 [shape = 'u32[144,128]{1,0:T(1,128)}', space=vmem, size = 0x12000, scoped, tag = 'internal scratch']
  #allocation2 [shape = 'f32[8,256]{1,0:T(8,128)}', space=vmem, size = 0x2000, scoped, tag = 'scratch operand']
  %s0 = inlined_call_operand.vmem [shape: bf16[2,6,32,4], index: 0, kind: input, shape index: {}]
  %s1 = inlined_call_operand.vmem [shape: bf16[4,256], index: 1, kind: input, shape index: {}]
  %s2 = inlined_call_operand.vmem [shape: f32[1,256], index: 2, kind: input, shape index: {}]
  %s3 = inlined_call_operand.hbm [shape: f32[6,2,1,256], index: 3, kind: output, shape index: {}]
  %s4 = sld [smem:[#allocation0]]
  $region53: #{tpu_custom_call.1} parent=0
    _
  %s6 = ssub.s32 1, %s4
  %s7 = scalar_select 0, %s6, %s4
  $region1: #{tpu_custom_call.1} parent=0
    #allocation3 [shape = 'u8[2048]{0}', space=vmem, size = 0x800, scoped, tag = 'output window, operand 0']
    #allocation4 [shape = 's32[2]{0}', space=sflag, size = 0x8, scoped, tag = 'scoped memory for tpu_custom_call.1']
    %8 = vsyncpa [#allocation4], 0
    %s9 = scalar_lea.sflag [#allocation4], 1
    %10 = vsyncpa %s9, 0
    loop: start=0, step=1, limit=14
    $region2: #{tpu_custom_call.1} parent=1 // loop_pre_header
      _
    $region3: #{tpu_custom_call.1} parent=1 // loop_header
      %s12 = sphi 0, %s16
      %p13 = scmp.ge.s32.totalorder %s12, 14
      %s19 = sphi 0, %s38
      %s20 = sphi 0, %s34
      %s21 = sphi 0, %s30
      %s22 = sphi 0, %s19
      %s23 = sphi 0, %s20
      %s24 = sphi 0, %s21
      %s25 = sphi 0, %s22
      %s26 = sphi 0, %s23
      %s27 = sphi 0, %s24
      %s45 = sphi 0, %s47
      %s48 = sphi 0, %s45
      %s49 = sphi 0, %s48
      %s65 = sphi 0, %s49
      %s69 = sphi 0, %s69
      %s71 = sphi 0, %s69
      %s72 = sphi 0, %s71
      %s86 = sphi 0, %s72
      %s90 = sphi 0, %s90
      %s92 = sphi 0, %s90
      %s93 = sphi 0, %s92
      %s107 = sphi 0, %s93
      %s115 = sphi 0, %s117
      %s118 = sphi 0, %s115
      %s119 = sphi 0, %s118
      %s135 = sphi 0, %s119
    $region4: #{tpu_custom_call.1} parent=1 // loop_header_branch
      %15 = sbr.rel (%p13) target = $region8
    $region5: #{tpu_custom_call.1} parent=1 // loop_body
      %s17 = ssub.s32 %s12, 1
      %s18 = ssub.s32 %s12, 2
      %s28 = sadd.s32 1, %s21
      %p29 = scmp.ge.s32.totalorder %s28, 1
      %s30 = scalar_select %p29, 0, %s28
      %s31 = sadd.s32 1, %s20
      %s32 = scalar_select %p29, %s31, %s20
      %p33 = scmp.ge.s32.totalorder %s32, 2
      %s34 = scalar_select %p33, 0, %s32
      %s35 = sadd.s32 1, %s19
      %s36 = scalar_select %p33, %s35, %s19
      %p37 = scmp.ge.s32.totalorder %s36, 6
      %s38 = scalar_select %p37, 0, %s36
      %s39 = ssub.s32 %s20, %s34
      %s40 = ssub.s32 %s19, %s38
      %s41 = sor.u32 %s39, %s40
      %s42 = ssub.s32 %s21, %s30
      %s43 = sor.u32 %s41, %s42
      %p44 = scmp.eq.s32.totalorder %s43, 0
      %s46 = sadd.s32 %s45, 1
      %s47 = scalar_select %p44, %s45, %s46
      %p50 = pneg %p44
      %p51 = scmp.eq.s32.totalorder %s12, 11
      %p52 = por %p50, %p51
      %p53 = scmp.ne.s32.totalorder %s45, %s48
      %p54 = scmp.eq.s32.totalorder %s12, 0
      %p55 = por %p53, %p54
      %p56 = scmp.ne.s32.totalorder %s45, %s48
      %p57 = scmp.eq.s32.totalorder %s17, 11
      %p58 = por %p56, %p57
      %p59 = scmp.ne.s32.totalorder %s48, %s49
      %p60 = scmp.eq.s32.totalorder %s17, 0
      %p61 = por %p59, %p60
      %p62 = scmp.ne.s32.totalorder %s48, %s49
      %p63 = scmp.eq.s32.totalorder %s18, 11
      %p64 = por %p62, %p63
      %p66 = scmp.ne.s32.totalorder %s49, %s65
      %p67 = scmp.eq.s32.totalorder %s18, 0
      %p68 = por %p66, %p67
      %s70 = sadd.s32 %s69, 1
      %p73 = scmp.eq.s32.totalorder %s12, 11
      %p74 = scmp.ne.s32.totalorder %s69, %s71
      %p75 = scmp.eq.s32.totalorder %s12, 0
      %p76 = por %p74, %p75
      %p77 = scmp.ne.s32.totalorder %s69, %s71
      %p78 = scmp.eq.s32.totalorder %s17, 11
      %p79 = por %p77, %p78
      %p80 = scmp.ne.s32.totalorder %s71, %s72
      %p81 = scmp.eq.s32.totalorder %s17, 0
      %p82 = por %p80, %p81
      %p83 = scmp.ne.s32.totalorder %s71, %s72
      %p84 = scmp.eq.s32.totalorder %s18, 11
      %p85 = por %p83, %p84
      %p87 = scmp.ne.s32.totalorder %s72, %s86
      %p88 = scmp.eq.s32.totalorder %s18, 0
      %p89 = por %p87, %p88
      %s91 = sadd.s32 %s90, 1
      %p94 = scmp.eq.s32.totalorder %s12, 11
      %p95 = scmp.ne.s32.totalorder %s90, %s92
      %p96 = scmp.eq.s32.totalorder %s12, 0
      %p97 = por %p95, %p96
      %p98 = scmp.ne.s32.totalorder %s90, %s92
      %p99 = scmp.eq.s32.totalorder %s17, 11
      %p100 = por %p98, %p99
      %p101 = scmp.ne.s32.totalorder %s92, %s93
      %p102 = scmp.eq.s32.totalorder %s17, 0
      %p103 = por %p101, %p102
      %p104 = scmp.ne.s32.totalorder %s92, %s93
      %p105 = scmp.eq.s32.totalorder %s18, 11
      %p106 = por %p104, %p105
      %p108 = scmp.ne.s32.totalorder %s93, %s107
      %p109 = scmp.eq.s32.totalorder %s18, 0
      %p110 = por %p108, %p109
      %s111 = ssub.s32 %s19, %s38
      %s112 = ssub.s32 %s20, %s34
      %s113 = sor.u32 %s111, %s112
      %p114 = scmp.eq.s32.totalorder %s113, 0
      %s116 = sadd.s32 %s115, 1
      %s117 = scalar_select %p114, %s115, %s116
      %p120 = pneg %p114
      %p121 = scmp.eq.s32.totalorder %s12, 11
      %p122 = por %p120, %p121
      %p123 = scmp.ne.s32.totalorder %s115, %s118
      %p124 = scmp.eq.s32.totalorder %s12, 0
      %p125 = por %p123, %p124
      %p126 = scmp.ne.s32.totalorder %s115, %s118
      %p127 = scmp.eq.s32.totalorder %s17, 11
      %p128 = por %p126, %p127
      %p129 = scmp.ne.s32.totalorder %s118, %s119
      %p130 = scmp.eq.s32.totalorder %s17, 0
      %p131 = por %p129, %p130
      %p132 = scmp.ne.s32.totalorder %s118, %s119
      %p133 = scmp.eq.s32.totalorder %s18, 11
      %p134 = por %p132, %p133
      %p136 = scmp.ne.s32.totalorder %s119, %s135
      %p137 = scmp.eq.s32.totalorder %s18, 0
      %p138 = por %p136, %p137
      %p139 = scmp.le.s32.totalorder 1, %s12
      %p140 = scmp.lt.s32.totalorder %s12, 13
      %p141 = pnand %p139, %p140
      %p142 = pneg %p141
      // Predicated region
      $region9: #{tpu_custom_call.1} parent=5 // pred_check
        _
      $region10: #{tpu_custom_call.1} parent=5 // pred_check_branch
        %144 = sbr.rel (%p141) target = $region12
      $region11: #{tpu_custom_call.1} parent=5 // pred_region
        %s145 = ssub.s32 %s12, 1
        // Predicated region
        $region13: #{tpu_custom_call.1} parent=11 // pred_check
          %p146 = pneg %p82
        $region14: #{tpu_custom_call.1} parent=11 // pred_check_branch
          %148 = sbr.rel (%p146) target = $region16
        $region15: #{tpu_custom_call.1} parent=11 // pred_region
          _
        $region16: #{tpu_custom_call.1} parent=11 // pred_fallthru
          _
        // Predicated region
        $region17: #{tpu_custom_call.1} parent=11 // pred_check
          %p149 = pneg %p103
        $region18: #{tpu_custom_call.1} parent=11 // pred_check_branch
          %151 = sbr.rel (%p149) target = $region20
        $region19: #{tpu_custom_call.1} parent=11 // pred_region
          _
        $region20: #{tpu_custom_call.1} parent=11 // pred_fallthru
          _
      $region12: #{tpu_custom_call.1} parent=5 // pred_fallthru
        _
      %p152 = scmp.lt.s32.totalorder %s12, 12
      // Predicated region
      $region21: #{tpu_custom_call.1} parent=5 // pred_check
        %p153 = pneg %p152
      $region22: #{tpu_custom_call.1} parent=5 // pred_check_branch
        %155 = sbr.rel (%p153) target = $region24
      $region23: #{tpu_custom_call.1} parent=5 // pred_region
        // Predicated region
        $region25: #{tpu_custom_call.1} parent=23 // pred_check
          %p156 = pneg %p55
        $region26: #{tpu_custom_call.1} parent=23 // pred_check_branch
          %158 = sbr.rel (%p156) target = $region28
        $region27: #{tpu_custom_call.1} parent=23 // pred_region
          %s159 = smul.u32 4, %s21
          %p160 = scmp.lt.s32.totalorder %s20, 1
          %s161 = scalar_select %p160, %s20, 1
          %p162 = scmp.lt.s32.totalorder %s19, 5
          %s163 = scalar_select %p162, %s19, 5
          %p164 = scmp.lt.s32.totalorder %s159, 3
          %s165 = scalar_select %p164, %s159, 3
          %s166 = smul.addr %s163, 4
          %s167 = sadd.s32 %s165, %s166
          %s168 = smul.addr %s161, 24
          %s169 = sadd.s32 %s167, %s168
          %s170 = smul.addr %s169, 4
          %s171 = scalar_lea.vmem %s0, %s170
          %s172 = smul.u32 4, %s21
        $region28: #{tpu_custom_call.1} parent=23 // pred_fallthru
          _
      $region24: #{tpu_custom_call.1} parent=5 // pred_fallthru
        _
      %p173 = scmp.le.s32.totalorder 1, %s12
      %p174 = scmp.lt.s32.totalorder %s12, 13
      %p175 = pnand %p173, %p174
      %p176 = pneg %p175
      // Predicated region
      $region29: #{tpu_custom_call.1} parent=5 // pred_check
        _
      $region30: #{tpu_custom_call.1} parent=5 // pred_check_branch
        %178 = sbr.rel (%p175) target = $region32
      $region31: #{tpu_custom_call.1} parent=5 // pred_region
        %s179 = ssub.s32 %s12, 1
        %s180 = smul.u32 4, %s24
        %p181 = scmp.lt.s32.totalorder %s23, 1
        %s182 = scalar_select %p181, %s23, 1
        %p183 = scmp.lt.s32.totalorder %s22, 5
        %s184 = scalar_select %p183, %s22, 5
        %p185 = scmp.lt.s32.totalorder %s180, 3
        %s186 = scalar_select %p185, %s180, 3
        %s187 = smul.addr %s184, 4
        %s188 = sadd.s32 %s186, %s187
        %s189 = smul.addr %s182, 24
        %s190 = sadd.s32 %s188, %s189
        %s191 = smul.addr %s190, 4
        %s192 = scalar_lea.vmem %s0, %s191
        %p193 = pneg %p61
        %p194 = pneg %p58
        %p195 = pneg %p82
        %p196 = pneg %p79
        %p197 = pneg %p103
        %p198 = pneg %p100
        %p199 = pneg %p131
        %p200 = pneg %p128
        %s201 = sand.u32 %s118, 1
        %s202 = scalar_lea.sflag [#allocation4], %s201
        %s203 = sand.u32 %s118, 1
        %s204 = smul.addr %s203, 2
        %s205 = scalar_lea.vmem [#allocation3], %s204
        %s206 = smul.u32 4, %s24
        %p207 = scmp.lt.s32.totalorder %s23, 1
        %s208 = scalar_select %p207, %s23, 1
        %p209 = scmp.lt.s32.totalorder %s22, 5
        %s210 = scalar_select %p209, %s22, 5
        %p211 = scmp.lt.s32.totalorder %s206, 3
        %s212 = scalar_select %p211, %s206, 3
        %s213 = smul.addr %s210, 4
        %s214 = sadd.s32 %s212, %s213
        %s215 = smul.addr %s208, 24
        %s216 = sadd.s32 %s214, %s215
        %s217 = smul.addr %s216, 4
        %s218 = scalar_lea.vmem %s0, %s217
        %s219 = smul.u32 4, %s24
        %p221 = scmp.eq.s32.totalorder %s24, 0
        // Predicated region
        $region33: #{tpu_custom_call.1} parent=31 // pred_check
          %p222 = pneg %p221
        $region34: #{tpu_custom_call.1} parent=31 // pred_check_branch
          %224 = sbr.rel (%p222) target = $region36
        $region35: #{tpu_custom_call.1} parent=31 // pred_region
          %225 = vst [vmem:[#allocation2] sm:$0xff] 0.0
          %226 = vst [vmem:[#allocation2 + $0x8] sm:$0xff] 0.0
        $region36: #{tpu_custom_call.1} parent=31 // pred_fallthru
          _
        %v227 = vld [vmem:[%s218] sm:$0xf]
        %v228 = vld [vmem:[%s218 + $0x4] sm:$0xf]
        %v229 = vld [vmem:[%s218 + $0x8] sm:$0xf]
        %v230 = vld [vmem:[%s218 + $0xc] sm:$0xf]
        %v231 = vld [vmem:[%s1] sm:$0xf]
        %v232 = vld [vmem:[%s2] sm:$0x3]
        %v234 = vlaneseq
        %v235 = vshrl.u32 %v234, 7
        %v236 = vsub.s32 0, %v235
        %v237 = vrot.slane %v232, %v236
        %v238 = vlaneseq
        %v239 = vshrl.u32 %v238, 7
        %v240 = vsub.s32 1, %v239
        %v241 = vrot.slane %v232, %v240
        %v248 = vunpack.c.l.b16 %v227
        %v249 = vunpack.c.l.b16 %v228
        %v250 = vunpack.c.l.b16 %v229
        %v251 = vunpack.c.l.b16 %v230
        %v252 = vpack.c.b16 %v249, %v248
        %v253 = vpack.c.b16 %v251, %v250
        %v256 = vunpack.c.l.s4 1983009808
        %v257 = vunpack.c.0.s8 %v256
        %v258 = vlaneseq
        %v259 = vshrl.u32 %v258, 7
        %v260 = vsub.s32 %v257, %v259
        %v261 = vrot.slane %v231, %v260
        %v262 = vcombine.high %v261, %v261
        %vm263 = vcmask 31744
        %v265 = vsel %vm263, %v252, 0
        %v268 = vsel %vm263, %v253, 0
        %vm270 = vcmask 1041408
        %v272 = vsel %vm270, %v261, 0
        %v275 = vsel %vm270, %v262, 0
        %277 = vmatprep.subr.bf16.mxu0 %v275
        %278 = vmatpush1.bf16.msra.mxu0 %v272
        %279 = vmatprep.subr.bf16.mxu0 0
        %280 = vmatpush1.bf16.msra.mxu0 0
        %281 = vmatprep.subr.bf16.mxu0 0
        %282 = vmatpush1.bf16.msra.mxu0 0
        %283 = vmatprep.subr.bf16.mxu0 0
        %284 = vmatpush1.bf16.msra.mxu0 0
        %285 = vmatprep.subr.bf16.mxu0 0
        %286 = vmatpush1.bf16.msra.mxu0 0
        %287 = vmatprep.subr.bf16.mxu0 0
        %288 = vmatpush1.bf16.msra.mxu0 0
        %289 = vmatprep.subr.bf16.mxu0 0
        %290 = vmatpush1.bf16.msra.mxu0 0
        %291 = vmatprep.subr.bf16.mxu0 0
        %292 = vmatpush1.bf16.msra.mxu0 0
        %293 = vmatprep.subr.bf16.mxu0 0
        %294 = vmatpush1.bf16.msra.mxu0 0
        %295 = vmatprep.subr.bf16.mxu0 0
        %296 = vmatpush1.bf16.msra.mxu0 0
        %297 = vmatprep.subr.bf16.mxu0 0
        %298 = vmatpush1.bf16.msra.mxu0 0
        %299 = vmatprep.subr.bf16.mxu0 0
        %300 = vmatpush1.bf16.msra.mxu0 0
        %301 = vmatprep.subr.bf16.mxu0 0
        %302 = vmatpush1.bf16.msra.mxu0 0
        %303 = vmatprep.subr.bf16.mxu0 0
        %304 = vmatpush1.bf16.msra.mxu0 0
        %305 = vmatprep.subr.bf16.mxu0 0
        %306 = vmatpush1.bf16.msra.mxu0 0
        %307 = vmatprep.subr.bf16.mxu0 0
        %308 = vmatpush1.bf16.msra.mxu0 0
        %309 = vmatprep.mubr.bf16.mxu0 0
        %310 = vmatmul.mubr.bf16.gmra.mrb[0].mxu0 %v265
        %v311 = vpop.f32.mrb[0].mxu0
        %v312 = vadd.f32 %v237, %v311
        %v313 = vpop.f32.mrb[0].mxu0
        %v314 = vadd.f32 %v241, %v313
        %v315 = vpop.f32.mrb[0].mxu0
        %v316 = vadd.f32 %v237, %v315
        %v317 = vpop.f32.mrb[0].mxu0
        %v318 = vadd.f32 %v241, %v317
        %319 = vmatprep.mubr.bf16.mxu0 0
        %320 = vmatmul.mubr.bf16.gmra.mrb[0].mxu0 %v268
        %v321 = vpop.f32.mrb[0].mxu0
        %v322 = vadd.f32 %v237, %v321
        %v323 = vpop.f32.mrb[0].mxu0
        %v324 = vadd.f32 %v241, %v323
        %v325 = vpop.f32.mrb[0].mxu0
        %v326 = vadd.f32 %v237, %v325
        %v327 = vpop.f32.mrb[0].mxu0
        %v328 = vadd.f32 %v241, %v327
        %329 = vdwg.mxu0
        %v330 = vmax.f32 %v312, 0.0
        %v331 = vmax.f32 %v314, 0.0
        %v332 = vmax.f32 %v316, 0.0
        %v333 = vmax.f32 %v318, 0.0
        %v334 = vmax.f32 %v322, 0.0
        %v335 = vmax.f32 %v324, 0.0
        %v336 = vmax.f32 %v326, 0.0
        %v337 = vmax.f32 %v328, 0.0
        %v338 = vld [vmem:[#allocation2] sm:$0xff]
        %v339 = vld [vmem:[#allocation2 + $0x8] sm:$0xff]
        %v340 = vadd.f32 %v330, %v332
        %v341 = vadd.f32 %v340, %v334
        %v342 = vadd.f32 %v341, %v336
        %v343 = vadd.f32 %v331, %v333
        %v344 = vadd.f32 %v343, %v335
        %v345 = vadd.f32 %v344, %v337
        %v346 = vadd.f32 %v338, %v342
        %v347 = vadd.f32 %v339, %v345
        %348 = vst [vmem:[#allocation2] sm:$0xff] %v346
        %349 = vst [vmem:[#allocation2 + $0x8] sm:$0xff] %v347
        // Predicated region
        $region37: #{tpu_custom_call.1} parent=31 // pred_check
          %p350 = pneg %p221
        $region38: #{tpu_custom_call.1} parent=31 // pred_check_branch
          %352 = sbr.rel (%p350) target = $region40
        $region39: #{tpu_custom_call.1} parent=31 // pred_region
          %v353 = vld [vmem:[#allocation2] sm:$0xff]
          %v354 = vld [vmem:[#allocation2 + $0x8] sm:$0xff]
          %v355 = vrot.slane %v353, 4
          %v356 = vadd.f32 %v353, %v355
          %v357 = vrot.slane %v356, 2
          %v358 = vadd.f32 %v356, %v357
          %v359 = vrot.slane %v358, 1
          %v360 = vadd.f32 %v358, %v359
          %v361 = vrot.slane %v354, 4
          %v362 = vadd.f32 %v354, %v361
          %v363 = vrot.slane %v362, 2
          %v364 = vadd.f32 %v362, %v363
          %v365 = vrot.slane %v364, 1
          %v366 = vadd.f32 %v364, %v365
          %v367 = vmul.f32 %v360, 0.03125
          %v368 = vmul.f32 %v366, 0.03125
          %v371 = vcombine.low %v367, %v368
          %v373 = vunpack.c.l.s4 1966171168
          %v374 = vunpack.c.0.s8 %v373
          %v375 = vlaneseq
          %v376 = vshrl.u32 %v375, 7
          %v377 = vsub.s32 %v374, %v376
          %v378 = vrot.slane %v371, %v377
          %v380 = vunpack.c.l.s4 1966171168
          %v381 = vunpack.c.0.s8 %v380
          %v382 = vlaneseq
          %v383 = vshrl.u32 %v382, 7
          %v384 = vsub.s32 %v381, %v383
          %v385 = vrot.slane %v378, %v384
          %v387 = vlaneseq
          %vm388 = vcmp.ge.s32.totalorder %v387, 0
          %vm389 = vcmp.lt.s32.totalorder %v387, 256
          %vm390 = vmand %vm388, %vm389
          %391 = vst.msk [vmem:[%s205] sm:$0x3] %vm390, %v385
        $region40: #{tpu_custom_call.1} parent=31 // pred_fallthru
          _
        %s392 = sand.u32 %s118, 1
        %s393 = scalar_lea.sflag [#allocation4], %s392
        %s394 = sand.u32 %s118, 1
        %s395 = smul.addr %s394, 2
        %s396 = scalar_lea.vmem [#allocation3], %s395
        // Predicated region
        $region41: #{tpu_custom_call.1} parent=31 // pred_check
          %p397 = pneg %p128
        $region42: #{tpu_custom_call.1} parent=31 // pred_check_branch
          %399 = sbr.rel (%p397) target = $region44
        $region43: #{tpu_custom_call.1} parent=31 // pred_region
          %s401 = ssub.s32 32, 32
          %402 = vsyncadd %s393, %s401
          %s403 = smul.addr %s23, 2
          %s404 = smul.addr %s22, 4
          %s405 = sadd.s32 %s403, %s404
          %s406 = smul.addr %s405, 16
          %s407 = scalar_lea.hbm %s3, %s406
          %s409 = sshll.u32 %s396, 4
          %s410 = int_to_ptr.vmem [resolvable:$true] %s409
          %412 = dma.vmem_to_hbm [thread:$0]  %s410, 32, %s407, %s393
        $region44: #{tpu_custom_call.1} parent=31 // pred_fallthru
          _
      $region32: #{tpu_custom_call.1} parent=5 // pred_fallthru
        _
      %p413 = scmp.le.s32.totalorder 2, %s12
      // Predicated region
      $region45: #{tpu_custom_call.1} parent=5 // pred_check
        %p414 = pneg %p413
      $region46: #{tpu_custom_call.1} parent=5 // pred_check_branch
        %416 = sbr.rel (%p414) target = $region48
      $region47: #{tpu_custom_call.1} parent=5 // pred_region
        %s417 = ssub.s32 %s12, 2
        // Predicated region
        $region49: #{tpu_custom_call.1} parent=47 // pred_check
          %p418 = pneg %p134
        $region50: #{tpu_custom_call.1} parent=47 // pred_check_branch
          %420 = sbr.rel (%p418) target = $region52
        $region51: #{tpu_custom_call.1} parent=47 // pred_region
          %s421 = sand.u32 %s119, 1
          %s422 = scalar_lea.sflag [#allocation4], %s421
          %s423 = sand.u32 %s119, 1
          %s424 = smul.addr %s423, 2
          %s425 = scalar_lea.vmem [#allocation3], %s424
          %426 = dma.done %s422, 32
        $region52: #{tpu_custom_call.1} parent=47 // pred_fallthru
          _
      $region48: #{tpu_custom_call.1} parent=5 // pred_fallthru
        _
    $region6: #{tpu_custom_call.1} parent=1 // loop_footer
      %s16 = sadd.s32 1, %s12
    $region7: #{tpu_custom_call.1} parent=1 // loop_footer_branch
      %11 = sbr.rel target = $region3
    $region8: #{tpu_custom_call.1} parent=1 // loop_exit
      _
    %427 = vsyncpa [#allocation4], 1
    %s428 = scalar_lea.sflag [#allocation4], 1
    %429 = vsyncpa %s428, 1

</llo_original>
